<compile_context>
chip_gen: v7x
topology: tpu7x:2x2x1
jax: 0.10.0
libtpu: 0.0.40
codegen_flags: <defaults>
</compile_context>

<pallas_src>
import jax
import jax.numpy as jnp
from jax.experimental import pallas as pl
from jax.experimental.pallas import tpu as pltpu


def _round_up(x, m):
    return (x + m - 1) // m * m


def mlp_kernel(x_ref, w1_ref, b1_ref, w2_ref, b2_ref, w3_ref, b3_ref, o_ref):
    # Three MXU matmuls fed at the weight dtype (bf16 stays bf16 -> full MXU
    # feed rate), f32 accumulation, f32 VPU epilogue for bias-add + ReLU.
    x = x_ref[...].astype(w1_ref.dtype)

    h1 = jnp.dot(x, w1_ref[...], preferred_element_type=jnp.float32)
    h1 = jnp.maximum(h1 + b1_ref[...].astype(jnp.float32), 0.0)

    h2 = jnp.dot(h1.astype(w2_ref.dtype), w2_ref[...],
                 preferred_element_type=jnp.float32)
    h2 = jnp.maximum(h2 + b2_ref[...].astype(jnp.float32), 0.0)

    out = jnp.dot(h2.astype(w3_ref.dtype), w3_ref[...],
                  preferred_element_type=jnp.float32)
    out = out + b3_ref[...].astype(jnp.float32)
    o_ref[...] = out.astype(o_ref.dtype)


def _device_flags():
    try:
        kind = jax.devices()[0].device_kind.lower()
    except Exception:
        kind = ""
    two_tc = "v7" in kind  # v7x: 2 TensorCores per chip
    return kind, two_tc


def _plan_batch(B, *, two_tc, cap):
    """Pick (batch_tile, padded_B).

    Small/medium B: pad (cheap at this size) to an exact multiple so the grid
    has exactly 1 step on single-TC chips (v5e/v6e) and >= 2 steps per core on
    v7x. Large B: never jnp.pad the input (full HBM round trip) — use
    cap-sized tiles and let the ragged last block be handled by Pallas'
    masked boundary reads/writes.
    """
    cap = max(8, _round_up(cap, 8))
    B8 = _round_up(max(B, 8), 8)
    min_steps = 4 if two_tc else 1
    if B8 <= min_steps * cap:
        steps = min(min_steps, pl.cdiv(B8, 8))
        tile = _round_up(pl.cdiv(B8, steps), 8)
        return tile, tile * steps
    tile = min(cap, (B // 8) * 8)
    return tile, B


def audio_only_mlp(x, params, *, batch_tile=None, batch_tile_cap=2048,
                   pad_output=None, pad_hidden=False, compute_dtype=None):
    """Run the 3-layer MLP with a Pallas kernel tiled over the batch axis."""
    w1, b1, w2, b2, w3, b3 = params
    # Accept PyTorch-style 1-D biases as well as (1, N).
    b1, b2, b3 = (b.reshape(1, -1) for b in (b1, b2, b3))

    # Optional low-precision MXU feed (weights + activations); accumulation and
    # the bias/ReLU epilogue stay f32 inside the kernel.
    if compute_dtype is not None:
        x = x.astype(compute_dtype)
        w1, w2, w3 = (w.astype(compute_dtype) for w in (w1, w2, w3))

    B, audio_dim = x.shape
    hidden_dim = w1.shape[1]
    output_dim = w3.shape[1]
    out_dtype = x.dtype

    _, two_tc = _device_flags()

    # Optional hidden-dim padding (e.g. 64 -> 128): lane-dense intermediates
    # for the bias/ReLU epilogue. ReLU(0 + 0) = 0 keeps padded lanes zero.
    if pad_hidden:
        hpad = _round_up(hidden_dim, 128)
        if hpad != hidden_dim:
            dh = hpad - hidden_dim
            w1 = jnp.pad(w1, ((0, 0), (0, dh)))
            b1 = jnp.pad(b1, ((0, 0), (0, dh)))
            w2 = jnp.pad(w2, ((0, dh), (0, dh)))
            b2 = jnp.pad(b2, ((0, 0), (0, dh)))
            w3 = jnp.pad(w3, ((0, dh), (0, 0)))
            hidden_dim = hpad

    # Output-lane padding: 8x writeback inflation only pays off on v7x's
    # 3.2 TB/s HBM; v5e/v6e keep masked 16-lane stores and a no-op slice.
    if pad_output is None:
        pad_output = two_tc
    out_dim = output_dim
    if pad_output:
        out_dim = _round_up(output_dim, 128)
        if out_dim != output_dim:
            w3 = jnp.pad(w3, ((0, 0), (0, out_dim - output_dim)))
            b3 = jnp.pad(b3, ((0, 0), (0, out_dim - output_dim)))

    # ---- batch tiling ----
    if batch_tile is None:
        tile, padded_B = _plan_batch(B, two_tc=two_tc, cap=batch_tile_cap)
    else:
        tile = max(8, _round_up(int(batch_tile), 8))
        padded_B = tile if B < tile else B  # ragged tails handled by masking

    if padded_B != B:
        x = jnp.pad(x, ((0, padded_B - B), (0, 0)))

    grid = (pl.cdiv(padded_B, tile),)

    in_specs = [
        pl.BlockSpec((tile, audio_dim), lambda i: (i, 0)),          # x (batch-tiled)
        # Grid-invariant weights/biases: constant index_map keeps them resident
        # in VMEM across grid steps (~tens of KB total).
        pl.BlockSpec((audio_dim, hidden_dim), lambda i: (0, 0)),    # w1
        pl.BlockSpec((1, hidden_dim), lambda i: (0, 0)),            # b1
        pl.BlockSpec((hidden_dim, hidden_dim), lambda i: (0, 0)),   # w2
        pl.BlockSpec((1, hidden_dim), lambda i: (0, 0)),            # b2
        pl.BlockSpec((hidden_dim, out_dim), lambda i: (0, 0)),      # w3
        pl.BlockSpec((1, out_dim), lambda i: (0, 0)),               # b3
    ]
    out_specs = pl.BlockSpec((tile, out_dim), lambda i: (i, 0))

    def nbytes(a):
        return a.size * a.dtype.itemsize

    flops = 2 * padded_B * (audio_dim * hidden_dim
                            + hidden_dim * hidden_dim
                            + hidden_dim * out_dim)
    bytes_accessed = (nbytes(x) + nbytes(w1) + nbytes(b1) + nbytes(w2)
                      + nbytes(b2) + nbytes(w3) + nbytes(b3)
                      + padded_B * out_dim * jnp.dtype(out_dtype).itemsize)

    out = pl.pallas_call(
        mlp_kernel,
        out_shape=jax.ShapeDtypeStruct((padded_B, out_dim), out_dtype),
        grid_spec=pltpu.PrefetchScalarGridSpec(
            num_scalar_prefetch=0,
            grid=grid,
            in_specs=in_specs,
            out_specs=out_specs,
        ),
        compiler_params=pltpu.CompilerParams(
            dimension_semantics=("parallel",),
        ),
        cost_estimate=pl.CostEstimate(
            flops=flops, transcendentals=0, bytes_accessed=bytes_accessed),
    )(x, w1, b1, w2, b2, w3, b3)

    if padded_B != B or out_dim != output_dim:
        out = out[:B, :output_dim]
    return out


def init_params(key, audio_dim, hidden_dim, output_dim, dtype=jnp.float32):
    """PyTorch-Linear-style uniform init (U[-1/sqrt(fan_in), 1/sqrt(fan_in)]); 1-D biases."""
    ks = jax.random.split(key, 6)

    def lin(kw, kb, fan_in, fan_out):
        bound = 1.0 / (fan_in ** 0.5)
        w = jax.random.uniform(kw, (fan_in, fan_out), dtype, -bound, bound)
        b = jax.random.uniform(kb, (fan_out,), dtype, -bound, bound)
        return w, b

    w1, b1 = lin(ks[0], ks[1], audio_dim, hidden_dim)
    w2, b2 = lin(ks[2], ks[3], hidden_dim, hidden_dim)
    w3, b3 = lin(ks[4], ks[5], hidden_dim, output_dim)
    return (w1, b1, w2, b2, w3, b3)


def mlp_reference(x, params):
    w1, b1, w2, b2, w3, b3 = params
    h1 = jnp.maximum(x @ w1 + b1.reshape(1, -1), 0.0)
    h2 = jnp.maximum(h1 @ w2 + b2.reshape(1, -1), 0.0)
    return h2 @ w3 + b3.reshape(1, -1)


if __name__ == "__main__":
    key = jax.random.PRNGKey(0)
    k_x, k_x2, k_p = jax.random.split(key, 3)

    audio_dim, hidden_dim, output_dim = 32, 64, 16
    params = init_params(k_p, audio_dim, hidden_dim, output_dim)

    # Small batch: single fat tile on v5e/v6e, two 8-row tiles on v7x.
    batch = 16
    x = jax.random.normal(k_x, (batch, audio_dim), jnp.float32)
    out = jax.block_until_ready(audio_only_mlp(x, params))
    ref = mlp_reference(x, params)
    assert out.shape == (batch, output_dim)
    assert jnp.allclose(out, ref, atol=1e-5, rtol=1e-5), "mismatch (B=16)"

    # Ragged batch (B=100, not a multiple of 8) exercises padding/slicing.
    batch2 = 100
    x2 = jax.random.normal(k_x2, (batch2, audio_dim), jnp.float32)
    out2 = jax.block_until_ready(audio_only_mlp(x2, params))
    ref2 = mlp_reference(x2, params)
    assert out2.shape == (batch2, output_dim)
    assert jnp.allclose(out2, ref2, atol=1e-5, rtol=1e-5), "mismatch (B=100)"

    # Explicit batch_tile (multi-step, masked boundary block) + lane-padded output.
    out3 = jax.block_until_ready(
        audio_only_mlp(x2, params, batch_tile=32, pad_output=True))
    assert out3.shape == (batch2, output_dim)
    assert jnp.allclose(out3, ref2, atol=1e-5, rtol=1e-5), "mismatch (tiled/padded)"

    # bf16 MXU-feed path (f32 accumulate + f32 epilogue in-kernel).
    out_bf = jax.block_until_ready(
        audio_only_mlp(x, params, compute_dtype=jnp.bfloat16))
    assert out_bf.shape == (batch, output_dim)
    assert jnp.allclose(out_bf.astype(jnp.float32), ref, atol=5e-2, rtol=5e-2), \
        "mismatch (bf16 path)"

    print("KERNEL_OK")
</pallas_src>

<mosaic_0001>
module attributes {stable_mosaic.version = 11 : i64} {
  func.func @mlp_kernel(%arg0: i32, %arg1: memref<16x32xf32, #tpu.memory_space<vmem>>, %arg2: memref<32x64xf32, #tpu.memory_space<vmem>>, %arg3: memref<1x64xf32, #tpu.memory_space<vmem>>, %arg4: memref<64x64xf32, #tpu.memory_space<vmem>>, %arg5: memref<1x64xf32, #tpu.memory_space<vmem>>, %arg6: memref<64x16xf32, #tpu.memory_space<vmem>>, %arg7: memref<1x16xf32, #tpu.memory_space<vmem>>, %arg8: memref<16x16xf32, #tpu.memory_space<vmem>>) attributes {dimension_semantics = [#tpu.dimension_semantics<parallel>], iteration_bounds = array<i64: 1>, scalar_prefetch = 0 : i64, scratch_operands = 0 : i64, tpu.core_type = #tpu.core_type<tc>, window_params = [{transform_indices = @transform_0, window_bounds = array<i64: 16, 32>}, {pipeline_mode = #tpu.pipeline_mode<synchronous>, transform_indices = @transform_1, window_bounds = array<i64: 32, 64>}, {pipeline_mode = #tpu.pipeline_mode<synchronous>, transform_indices = @transform_2, window_bounds = array<i64: 1, 64>}, {pipeline_mode = #tpu.pipeline_mode<synchronous>, transform_indices = @transform_3, window_bounds = array<i64: 64, 64>}, {pipeline_mode = #tpu.pipeline_mode<synchronous>, transform_indices = @transform_4, window_bounds = array<i64: 1, 64>}, {pipeline_mode = #tpu.pipeline_mode<synchronous>, transform_indices = @transform_5, window_bounds = array<i64: 64, 16>}, {pipeline_mode = #tpu.pipeline_mode<synchronous>, transform_indices = @transform_6, window_bounds = array<i64: 1, 16>}, {transform_indices = @transform_7, window_bounds = array<i64: 16, 16>}]} {
    %c0 = arith.constant 0 : index
    %c0_0 = arith.constant 0 : index
    %0 = vector.load %arg1[%c0, %c0_0] : memref<16x32xf32, #tpu.memory_space<vmem>>, vector<16x32xf32>
    %c0_1 = arith.constant 0 : index
    %c0_2 = arith.constant 0 : index
    %1 = vector.load %arg2[%c0_1, %c0_2] : memref<32x64xf32, #tpu.memory_space<vmem>>, vector<32x64xf32>
    %cst = arith.constant dense<0.000000e+00> : vector<16x64xf32>
    %2 = tpu.matmul %0, %1, %cst {dimension_numbers = #tpu.dot_dimension_numbers<[1], [0], [0], [1], [0, 0, 1, 1], [], []>} : vector<16x32xf32>, vector<32x64xf32>, vector<16x64xf32> -> vector<16x64xf32>
    %c0_3 = arith.constant 0 : index
    %c0_4 = arith.constant 0 : index
    %3 = vector.load %arg3[%c0_3, %c0_4] : memref<1x64xf32, #tpu.memory_space<vmem>>, vector<1x64xf32>
    %4 = vector.broadcast %3 : vector<1x64xf32> to vector<16x64xf32>
    %5 = arith.addf %2, %4 : vector<16x64xf32>
    %cst_5 = arith.constant 0.000000e+00 : f32
    %6 = vector.broadcast %cst_5 : f32 to vector<16x64xf32>
    %7 = arith.maximumf %5, %6 : vector<16x64xf32>
    %c0_6 = arith.constant 0 : index
    %c0_7 = arith.constant 0 : index
    %8 = vector.load %arg4[%c0_6, %c0_7] : memref<64x64xf32, #tpu.memory_space<vmem>>, vector<64x64xf32>
    %cst_8 = arith.constant dense<0.000000e+00> : vector<16x64xf32>
    %9 = tpu.matmul %7, %8, %cst_8 {dimension_numbers = #tpu.dot_dimension_numbers<[1], [0], [0], [1], [0, 0, 1, 1], [], []>} : vector<16x64xf32>, vector<64x64xf32>, vector<16x64xf32> -> vector<16x64xf32>
    %c0_9 = arith.constant 0 : index
    %c0_10 = arith.constant 0 : index
    %10 = vector.load %arg5[%c0_9, %c0_10] : memref<1x64xf32, #tpu.memory_space<vmem>>, vector<1x64xf32>
    %11 = vector.broadcast %10 : vector<1x64xf32> to vector<16x64xf32>
    %12 = arith.addf %9, %11 : vector<16x64xf32>
    %cst_11 = arith.constant 0.000000e+00 : f32
    %13 = vector.broadcast %cst_11 : f32 to vector<16x64xf32>
    %14 = arith.maximumf %12, %13 : vector<16x64xf32>
    %c0_12 = arith.constant 0 : index
    %c0_13 = arith.constant 0 : index
    %15 = vector.load %arg6[%c0_12, %c0_13] : memref<64x16xf32, #tpu.memory_space<vmem>>, vector<64x16xf32>
    %cst_14 = arith.constant dense<0.000000e+00> : vector<16x16xf32>
    %16 = tpu.matmul %14, %15, %cst_14 {dimension_numbers = #tpu.dot_dimension_numbers<[1], [0], [0], [1], [0, 0, 1, 1], [], []>} : vector<16x64xf32>, vector<64x16xf32>, vector<16x16xf32> -> vector<16x16xf32>
    %c0_15 = arith.constant 0 : index
    %c0_16 = arith.constant 0 : index
    %17 = vector.load %arg7[%c0_15, %c0_16] : memref<1x16xf32, #tpu.memory_space<vmem>>, vector<1x16xf32>
    %18 = vector.broadcast %17 : vector<1x16xf32> to vector<16x16xf32>
    %19 = arith.addf %16, %18 : vector<16x16xf32>
    %c0_17 = arith.constant 0 : index
    %c0_18 = arith.constant 0 : index
    %20 = vector.load %arg8[%c0_17, %c0_18] : memref<16x16xf32, #tpu.memory_space<vmem>>, vector<16x16xf32>
    tpu.vector_store %arg8[%c0_17, %c0_18], %19 {strides = array<i32>} : memref<16x16xf32, #tpu.memory_space<vmem>>, vector<16x16xf32>,
    return
  }
  func.func @transform_0(%arg0: i32) -> (i32, i32) {
    %c0_i32 = arith.constant 0 : i32
    %c0_i32_0 = arith.constant 0 : i32
    return %arg0, %c0_i32 : i32, i32
  }
  func.func @transform_1(%arg0: i32) -> (i32, i32) {
    %c0_i32 = arith.constant 0 : i32
    %c0_i32_0 = arith.constant 0 : i32
    %c0_i32_1 = arith.constant 0 : i32
    return %c0_i32, %c0_i32_0 : i32, i32
  }
  func.func @transform_2(%arg0: i32) -> (i32, i32) {
    %c0_i32 = arith.constant 0 : i32
    %c0_i32_0 = arith.constant 0 : i32
    %c0_i32_1 = arith.constant 0 : i32
    return %c0_i32, %c0_i32_0 : i32, i32
  }
  func.func @transform_3(%arg0: i32) -> (i32, i32) {
    %c0_i32 = arith.constant 0 : i32
    %c0_i32_0 = arith.constant 0 : i32
    %c0_i32_1 = arith.constant 0 : i32
    return %c0_i32, %c0_i32_0 : i32, i32
  }
  func.func @transform_4(%arg0: i32) -> (i32, i32) {
    %c0_i32 = arith.constant 0 : i32
    %c0_i32_0 = arith.constant 0 : i32
    %c0_i32_1 = arith.constant 0 : i32
    return %c0_i32, %c0_i32_0 : i32, i32
  }
  func.func @transform_5(%arg0: i32) -> (i32, i32) {
    %c0_i32 = arith.constant 0 : i32
    %c0_i32_0 = arith.constant 0 : i32
    %c0_i32_1 = arith.constant 0 : i32
    return %c0_i32, %c0_i32_0 : i32, i32
  }
  func.func @transform_6(%arg0: i32) -> (i32, i32) {
    %c0_i32 = arith.constant 0 : i32
    %c0_i32_0 = arith.constant 0 : i32
    %c0_i32_1 = arith.constant 0 : i32
    return %c0_i32, %c0_i32_0 : i32, i32
  }
  func.func @transform_7(%arg0: i32) -> (i32, i32) {
    %c0_i32 = arith.constant 0 : i32
    %c0_i32_0 = arith.constant 0 : i32
    return %arg0, %c0_i32 : i32, i32
  }
}

</mosaic_0001>

<llo_original>
// kernel: tpu_custom_call.1
$region0: #{tpu_custom_call.1}
  #allocation0 [shape = 'u32[]', space=smem, size = 0x4, offset = 0x4, fixed_abs, tag = 'smem constant byte address 0x4 - core index']
  #allocation1 [shape = 'u32[144,128]{1,0:T(1,128)}', space=vmem, size = 0x12000, scoped, tag = 'internal scratch']
  %s0 = inlined_call_operand.vmem [shape: f32[16,32], index: 0, kind: input, shape index: {}]
  %s1 = inlined_call_operand.hbm [shape: f32[32,64], index: 1, kind: input, shape index: {}]
  %s2 = inlined_call_operand.vmem [shape: f32[1,64], index: 2, kind: input, shape index: {}]
  %s3 = inlined_call_operand.vmem [shape: f32[64,64], index: 3, kind: input, shape index: {}]
  %s4 = inlined_call_operand.vmem [shape: f32[1,64], index: 4, kind: input, shape index: {}]
  %s5 = inlined_call_operand.vmem [shape: f32[64,16], index: 5, kind: input, shape index: {}]
  %s6 = inlined_call_operand.vmem [shape: f32[1,16], index: 6, kind: input, shape index: {}]
  %s7 = inlined_call_operand.hbm [shape: f32[16,16], index: 7, kind: output, shape index: {}]
  %s8 = sld [smem:[#allocation0]]
  $region42: #{tpu_custom_call.1} parent=0
    _
  %s10 = ssub.s32 1, %s8
  %s11 = scalar_select 0, %s10, %s8
  $region1: #{tpu_custom_call.1} parent=0
    #allocation2 [shape = 'u8[16384]{0}', space=vmem, size = 0x4000, scoped, tag = 'input window, operand 1, single buffered']
    #allocation3 [shape = 's32[1]{0}', space=sflag, size = 0x4, scoped, tag = 'scoped memory for tpu_custom_call.1']
    #allocation4 [shape = 's32[1]{0}', space=sflag, size = 0x4, scoped, tag = 'scoped memory for tpu_custom_call.1']
    #allocation5 [shape = 'u8[8192]{0}', space=vmem, size = 0x2000, scoped, tag = 'output window, operand 0, single buffered']
    %12 = vsyncpa [#allocation3], 0
    %13 = vsyncpa [#allocation4], 0
    // Predicated region
    $region2: #{tpu_custom_call.1} parent=1 // pred_check
      _
    $region3: #{tpu_custom_call.1} parent=1 // pred_check_branch
      %15 = sbr.rel (0) target = $region5
    $region4: #{tpu_custom_call.1} parent=1 // pred_region
      _
    $region5: #{tpu_custom_call.1} parent=1 // pred_fallthru
      _
    // Predicated region
    $region6: #{tpu_custom_call.1} parent=1 // pred_check
      _
    $region7: #{tpu_custom_call.1} parent=1 // pred_check_branch
      %17 = sbr.rel (0) target = $region9
    $region8: #{tpu_custom_call.1} parent=1 // pred_region
      %s19 = ssub.s32 512, 512
      %20 = vsyncadd [#allocation3], %s19
      %s21 = sshll.u32 [#allocation2], 4
      %s22 = int_to_ptr.vmem [resolvable:$true] %s21
      %27 = dma.hbm_to_vmem [thread:$0]  %s1, 512, %s22, [#allocation3], 128, 128, 8
    $region9: #{tpu_custom_call.1} parent=1 // pred_fallthru
      _
    // Predicated region
    $region10: #{tpu_custom_call.1} parent=1 // pred_check
      _
    $region11: #{tpu_custom_call.1} parent=1 // pred_check_branch
      %29 = sbr.rel (0) target = $region13
    $region12: #{tpu_custom_call.1} parent=1 // pred_region
      _
    $region13: #{tpu_custom_call.1} parent=1 // pred_fallthru
      _
    // Predicated region
    $region14: #{tpu_custom_call.1} parent=1 // pred_check
      _
    $region15: #{tpu_custom_call.1} parent=1 // pred_check_branch
      %31 = sbr.rel (0) target = $region17
    $region16: #{tpu_custom_call.1} parent=1 // pred_region
      _
    $region17: #{tpu_custom_call.1} parent=1 // pred_fallthru
      _
    // Predicated region
    $region18: #{tpu_custom_call.1} parent=1 // pred_check
      _
    $region19: #{tpu_custom_call.1} parent=1 // pred_check_branch
      %33 = sbr.rel (0) target = $region21
    $region20: #{tpu_custom_call.1} parent=1 // pred_region
      _
    $region21: #{tpu_custom_call.1} parent=1 // pred_fallthru
      _
    // Predicated region
    $region22: #{tpu_custom_call.1} parent=1 // pred_check
      _
    $region23: #{tpu_custom_call.1} parent=1 // pred_check_branch
      %35 = sbr.rel (0) target = $region25
    $region24: #{tpu_custom_call.1} parent=1 // pred_region
      _
    $region25: #{tpu_custom_call.1} parent=1 // pred_fallthru
      _
    // Predicated region
    $region26: #{tpu_custom_call.1} parent=1 // pred_check
      _
    $region27: #{tpu_custom_call.1} parent=1 // pred_check_branch
      %37 = sbr.rel (0) target = $region29
    $region28: #{tpu_custom_call.1} parent=1 // pred_region
      _
    $region29: #{tpu_custom_call.1} parent=1 // pred_fallthru
      _
    // Predicated region
    $region30: #{tpu_custom_call.1} parent=1 // pred_check
      _
    $region31: #{tpu_custom_call.1} parent=1 // pred_check_branch
      %39 = sbr.rel (0) target = $region33
    $region32: #{tpu_custom_call.1} parent=1 // pred_region
      %40 = dma.done [#allocation3], 512
    $region33: #{tpu_custom_call.1} parent=1 // pred_fallthru
      _
    %v41 = vld [vmem:[%s0] sm:$0xff]
    %v42 = vld [vmem:[%s0 + $0x8] sm:$0xff]
    %v43 = vld [vmem:[#allocation2] sm:$0xff]
    %v44 = vld [vmem:[#allocation2 + $0x8] sm:$0xff]
    %v45 = vld [vmem:[#allocation2 + $0x10] sm:$0xff]
    %v46 = vld [vmem:[#allocation2 + $0x18] sm:$0xff]
    %v47 = vld [vmem:[%s2] sm:$0x1]
    %v49 = vlaneseq
    %v50 = vshrl.u32 %v49, 7
    %v51 = vsub.s32 0, %v50
    %v52 = vrot.slane %v47, %v51
    %vm54 = vcmask 261120
    %v56 = vsel %vm54, %v41, 0
    %v59 = vsel %vm54, %v42, 0
    %61 = vmatprep.subr.mxu0 0.0
    %62 = vmatpush1.msra.mxu0 %v43
    %63 = vmatprep.subr.mxu0 0.0
    %64 = vmatpush1.msra.mxu0 %v44
    %65 = vmatprep.subr.mxu0 0.0
    %66 = vmatpush1.msra.mxu0 %v45
    %67 = vmatprep.subr.mxu0 0.0
    %68 = vmatpush1.msra.mxu0 %v46
    %69 = vmatprep.subr.mxu0 0.0
    %70 = vmatpush1.msra.mxu0 0.0
    %71 = vmatprep.subr.mxu0 0.0
    %72 = vmatpush1.msra.mxu0 0.0
    %73 = vmatprep.subr.mxu0 0.0
    %74 = vmatpush1.msra.mxu0 0.0
    %75 = vmatprep.subr.mxu0 0.0
    %76 = vmatpush1.msra.mxu0 0.0
    %77 = vmatprep.subr.mxu0 0.0
    %78 = vmatpush1.msra.mxu0 0.0
    %79 = vmatprep.subr.mxu0 0.0
    %80 = vmatpush1.msra.mxu0 0.0
    %81 = vmatprep.subr.mxu0 0.0
    %82 = vmatpush1.msra.mxu0 0.0
    %83 = vmatprep.subr.mxu0 0.0
    %84 = vmatpush1.msra.mxu0 0.0
    %85 = vmatprep.subr.mxu0 0.0
    %86 = vmatpush1.msra.mxu0 0.0
    %87 = vmatprep.subr.mxu0 0.0
    %88 = vmatpush1.msra.mxu0 0.0
    %89 = vmatprep.subr.mxu0 0.0
    %90 = vmatpush1.msra.mxu0 0.0
    %91 = vmatprep.subr.mxu0 0.0
    %92 = vmatpush1.msra.mxu0 0.0
    %93 = vmatprep.subr.mxu0 0.0
    %94 = vmatpush1.msra.mxu0 0.0
    %95 = vmatprep.subr.mxu0 0.0
    %96 = vmatpush1.msra.mxu0 0.0
    %97 = vmatprep.subr.mxu0 0.0
    %98 = vmatpush1.msra.mxu0 0.0
    %99 = vmatprep.subr.mxu0 0.0
    %100 = vmatpush1.msra.mxu0 0.0
    %101 = vmatprep.subr.mxu0 0.0
    %102 = vmatpush1.msra.mxu0 0.0
    %103 = vmatprep.subr.mxu0 0.0
    %104 = vmatpush1.msra.mxu0 0.0
    %105 = vmatprep.subr.mxu0 0.0
    %106 = vmatpush1.msra.mxu0 0.0
    %107 = vmatprep.subr.mxu0 0.0
    %108 = vmatpush1.msra.mxu0 0.0
    %109 = vmatprep.subr.mxu0 0.0
    %110 = vmatpush1.msra.mxu0 0.0
    %111 = vmatprep.subr.mxu0 0.0
    %112 = vmatpush1.msra.mxu0 0.0
    %113 = vmatprep.subr.mxu0 0.0
    %114 = vmatpush1.msra.mxu0 0.0
    %115 = vmatprep.subr.mxu0 0.0
    %116 = vmatpush1.msra.mxu0 0.0
    %117 = vmatprep.subr.mxu0 0.0
    %118 = vmatpush1.msra.mxu0 0.0
    %119 = vmatprep.subr.mxu0 0.0
    %120 = vmatpush1.msra.mxu0 0.0
    %121 = vmatprep.subr.mxu0 0.0
    %122 = vmatpush1.msra.mxu0 0.0
    %123 = vmatprep.subr.mxu0 0.0
    %124 = vmatpush1.msra.mxu0 0.0
    %125 = vmatprep.mubr.f32.mxu0 0.0
    %126 = vmatmul.mubr.f32.gmra.mrb[0].mxu0 %v56
    %v127 = vpop.f32.mrb[0].mxu0
    %v128 = vadd.f32 %v52, %v127
    %v129 = vpop.f32.mrb[0].mxu0
    %130 = vmatprep.mubr.f32.mxu0 0.0
    %131 = vmatmul.mubr.f32.gmra.mrb[0].mxu0 %v59
    %v132 = vpop.f32.mrb[0].mxu0
    %v133 = vadd.f32 %v52, %v132
    %v134 = vpop.f32.mrb[0].mxu0
    %135 = vdwg.mxu0
    %v136 = vmax.f32 %v128, 0.0
    %v137 = vmax.f32 %v133, 0.0
    %v138 = vld [vmem:[%s3] sm:$0xff]
    %v139 = vld [vmem:[%s3 + $0x8] sm:$0xff]
    %v140 = vld [vmem:[%s3 + $0x10] sm:$0xff]
    %v141 = vld [vmem:[%s3 + $0x18] sm:$0xff]
    %v142 = vld [vmem:[%s3 + $0x20] sm:$0xff]
    %v143 = vld [vmem:[%s3 + $0x28] sm:$0xff]
    %v144 = vld [vmem:[%s3 + $0x30] sm:$0xff]
    %v145 = vld [vmem:[%s3 + $0x38] sm:$0xff]
    %v146 = vld [vmem:[%s4] sm:$0x1]
    %v148 = vlaneseq
    %v149 = vshrl.u32 %v148, 7
    %v150 = vsub.s32 0, %v149
    %v151 = vrot.slane %v146, %v150
    %vm153 = vcmask 523264
    %v155 = vsel %vm153, %v136, 0
    %v158 = vsel %vm153, %v137, 0
    %160 = vmatprep.subr.mxu0 0.0
    %161 = vmatpush1.msra.mxu0 %v138
    %162 = vmatprep.subr.mxu0 0.0
    %163 = vmatpush1.msra.mxu0 %v139
    %164 = vmatprep.subr.mxu0 0.0
    %165 = vmatpush1.msra.mxu0 %v140
    %166 = vmatprep.subr.mxu0 0.0
    %167 = vmatpush1.msra.mxu0 %v141
    %168 = vmatprep.subr.mxu0 0.0
    %169 = vmatpush1.msra.mxu0 %v142
    %170 = vmatprep.subr.mxu0 0.0
    %171 = vmatpush1.msra.mxu0 %v143
    %172 = vmatprep.subr.mxu0 0.0
    %173 = vmatpush1.msra.mxu0 %v144
    %174 = vmatprep.subr.mxu0 0.0
    %175 = vmatpush1.msra.mxu0 %v145
    %176 = vmatprep.subr.mxu0 0.0
    %177 = vmatpush1.msra.mxu0 0.0
    %178 = vmatprep.subr.mxu0 0.0
    %179 = vmatpush1.msra.mxu0 0.0
    %180 = vmatprep.subr.mxu0 0.0
    %181 = vmatpush1.msra.mxu0 0.0
    %182 = vmatprep.subr.mxu0 0.0
    %183 = vmatpush1.msra.mxu0 0.0
    %184 = vmatprep.subr.mxu0 0.0
    %185 = vmatpush1.msra.mxu0 0.0
    %186 = vmatprep.subr.mxu0 0.0
    %187 = vmatpush1.msra.mxu0 0.0
    %188 = vmatprep.subr.mxu0 0.0
    %189 = vmatpush1.msra.mxu0 0.0
    %190 = vmatprep.subr.mxu0 0.0
    %191 = vmatpush1.msra.mxu0 0.0
    %192 = vmatprep.subr.mxu0 0.0
    %193 = vmatpush1.msra.mxu0 0.0
    %194 = vmatprep.subr.mxu0 0.0
    %195 = vmatpush1.msra.mxu0 0.0
    %196 = vmatprep.subr.mxu0 0.0
    %197 = vmatpush1.msra.mxu0 0.0
    %198 = vmatprep.subr.mxu0 0.0
    %199 = vmatpush1.msra.mxu0 0.0
    %200 = vmatprep.subr.mxu0 0.0
    %201 = vmatpush1.msra.mxu0 0.0
    %202 = vmatprep.subr.mxu0 0.0
    %203 = vmatpush1.msra.mxu0 0.0
    %204 = vmatprep.subr.mxu0 0.0
    %205 = vmatpush1.msra.mxu0 0.0
    %206 = vmatprep.subr.mxu0 0.0
    %207 = vmatpush1.msra.mxu0 0.0
    %208 = vmatprep.subr.mxu0 0.0
    %209 = vmatpush1.msra.mxu0 0.0
    %210 = vmatprep.subr.mxu0 0.0
    %211 = vmatpush1.msra.mxu0 0.0
    %212 = vmatprep.subr.mxu0 0.0
    %213 = vmatpush1.msra.mxu0 0.0
    %214 = vmatprep.subr.mxu0 0.0
    %215 = vmatpush1.msra.mxu0 0.0
    %216 = vmatprep.subr.mxu0 0.0
    %217 = vmatpush1.msra.mxu0 0.0
    %218 = vmatprep.subr.mxu0 0.0
    %219 = vmatpush1.msra.mxu0 0.0
    %220 = vmatprep.subr.mxu0 0.0
    %221 = vmatpush1.msra.mxu0 0.0
    %222 = vmatprep.subr.mxu0 0.0
    %223 = vmatpush1.msra.mxu0 0.0
    %224 = vmatprep.mubr.f32.mxu0 0.0
    %225 = vmatmul.mubr.f32.gmra.mrb[0].mxu0 %v155
    %v226 = vpop.f32.mrb[0].mxu0
    %v227 = vadd.f32 %v151, %v226
    %v228 = vpop.f32.mrb[0].mxu0
    %229 = vmatprep.mubr.f32.mxu0 0.0
    %230 = vmatmul.mubr.f32.gmra.mrb[0].mxu0 %v158
    %v231 = vpop.f32.mrb[0].mxu0
    %v232 = vadd.f32 %v151, %v231
    %v233 = vpop.f32.mrb[0].mxu0
    %234 = vdwg.mxu0
    %v235 = vmax.f32 %v227, 0.0
    %v236 = vmax.f32 %v232, 0.0
    %v237 = vld [vmem:[%s5] sm:$0xff]
    %v238 = vld [vmem:[%s5 + $0x8] sm:$0xff]
    %v239 = vld [vmem:[%s5 + $0x10] sm:$0xff]
    %v240 = vld [vmem:[%s5 + $0x18] sm:$0xff]
    %v241 = vld [vmem:[%s5 + $0x20] sm:$0xff]
    %v242 = vld [vmem:[%s5 + $0x28] sm:$0xff]
    %v243 = vld [vmem:[%s5 + $0x30] sm:$0xff]
    %v244 = vld [vmem:[%s5 + $0x38] sm:$0xff]
    %v245 = vld [vmem:[%s6] sm:$0x1]
    %v247 = vlaneseq
    %v248 = vshrl.u32 %v247, 7
    %v249 = vsub.s32 0, %v248
    %v250 = vrot.slane %v245, %v249
    %v253 = vsel %vm153, %v235, 0
    %v256 = vsel %vm153, %v236, 0
    %258 = vmatprep.subr.mxu0 0.0
    %259 = vmatpush1.msra.mxu0 %v237
    %260 = vmatprep.subr.mxu0 0.0
    %261 = vmatpush1.msra.mxu0 %v238
    %262 = vmatprep.subr.mxu0 0.0
    %263 = vmatpush1.msra.mxu0 %v239
    %264 = vmatprep.subr.mxu0 0.0
    %265 = vmatpush1.msra.mxu0 %v240
    %266 = vmatprep.subr.mxu0 0.0
    %267 = vmatpush1.msra.mxu0 %v241
    %268 = vmatprep.subr.mxu0 0.0
    %269 = vmatpush1.msra.mxu0 %v242
    %270 = vmatprep.subr.mxu0 0.0
    %271 = vmatpush1.msra.mxu0 %v243
    %272 = vmatprep.subr.mxu0 0.0
    %273 = vmatpush1.msra.mxu0 %v244
    %274 = vmatprep.subr.mxu0 0.0
    %275 = vmatpush1.msra.mxu0 0.0
    %276 = vmatprep.subr.mxu0 0.0
    %277 = vmatpush1.msra.mxu0 0.0
    %278 = vmatprep.subr.mxu0 0.0
    %279 = vmatpush1.msra.mxu0 0.0
    %280 = vmatprep.subr.mxu0 0.0
    %281 = vmatpush1.msra.mxu0 0.0
    %282 = vmatprep.subr.mxu0 0.0
    %283 = vmatpush1.msra.mxu0 0.0
    %284 = vmatprep.subr.mxu0 0.0
    %285 = vmatpush1.msra.mxu0 0.0
    %286 = vmatprep.subr.mxu0 0.0
    %287 = vmatpush1.msra.mxu0 0.0
    %288 = vmatprep.subr.mxu0 0.0
    %289 = vmatpush1.msra.mxu0 0.0
    %290 = vmatprep.subr.mxu0 0.0
    %291 = vmatpush1.msra.mxu0 0.0
    %292 = vmatprep.subr.mxu0 0.0
    %293 = vmatpush1.msra.mxu0 0.0
    %294 = vmatprep.subr.mxu0 0.0
    %295 = vmatpush1.msra.mxu0 0.0
    %296 = vmatprep.subr.mxu0 0.0
    %297 = vmatpush1.msra.mxu0 0.0
    %298 = vmatprep.subr.mxu0 0.0
    %299 = vmatpush1.msra.mxu0 0.0
    %300 = vmatprep.subr.mxu0 0.0
    %301 = vmatpush1.msra.mxu0 0.0
    %302 = vmatprep.subr.mxu0 0.0
    %303 = vmatpush1.msra.mxu0 0.0
    %304 = vmatprep.subr.mxu0 0.0
    %305 = vmatpush1.msra.mxu0 0.0
    %306 = vmatprep.subr.mxu0 0.0
    %307 = vmatpush1.msra.mxu0 0.0
    %308 = vmatprep.subr.mxu0 0.0
    %309 = vmatpush1.msra.mxu0 0.0
    %310 = vmatprep.subr.mxu0 0.0
    %311 = vmatpush1.msra.mxu0 0.0
    %312 = vmatprep.subr.mxu0 0.0
    %313 = vmatpush1.msra.mxu0 0.0
    %314 = vmatprep.subr.mxu0 0.0
    %315 = vmatpush1.msra.mxu0 0.0
    %316 = vmatprep.subr.mxu0 0.0
    %317 = vmatpush1.msra.mxu0 0.0
    %318 = vmatprep.subr.mxu0 0.0
    %319 = vmatpush1.msra.mxu0 0.0
    %320 = vmatprep.subr.mxu0 0.0
    %321 = vmatpush1.msra.mxu0 0.0
    %322 = vmatprep.mubr.f32.mxu0 0.0
    %323 = vmatmul.mubr.f32.gmra.mrb[0].mxu0 %v253
    %v324 = vpop.f32.mrb[0].mxu0
    %v325 = vadd.f32 %v250, %v324
    %v326 = vpop.f32.mrb[0].mxu0
    %327 = vmatprep.mubr.f32.mxu0 0.0
    %328 = vmatmul.mubr.f32.gmra.mrb[0].mxu0 %v256
    %v329 = vpop.f32.mrb[0].mxu0
    %v330 = vadd.f32 %v250, %v329
    %v331 = vpop.f32.mrb[0].mxu0
    %332 = vdwg.mxu0
    %vm333 = vcmask 130048
    %334 = vst.msk [vmem:[#allocation5] sm:$0xff] %vm333, %v325
    %335 = vst.msk [vmem:[#allocation5 + $0x8] sm:$0xff] %vm333, %v330
    // Predicated region
    $region34: #{tpu_custom_call.1} parent=1 // pred_check
      _
    $region35: #{tpu_custom_call.1} parent=1 // pred_check_branch
      %337 = sbr.rel (0) target = $region37
    $region36: #{tpu_custom_call.1} parent=1 // pred_region
      %s339 = ssub.s32 256, 256
      %340 = vsyncadd [#allocation4], %s339
      %s341 = sshll.u32 [#allocation5], 4
      %s342 = int_to_ptr.vmem [resolvable:$true] %s341
      %347 = dma.vmem_to_hbm [thread:$0]  %s342, 256, %s7, [#allocation4], 128, 128, 8
    $region37: #{tpu_custom_call.1} parent=1 // pred_fallthru
      _
    // Predicated region
    $region38: #{tpu_custom_call.1} parent=1 // pred_check
      _
    $region39: #{tpu_custom_call.1} parent=1 // pred_check_branch
      %349 = sbr.rel (0) target = $region41
    $region40: #{tpu_custom_call.1} parent=1 // pred_region
      %350 = dma.done [#allocation4], 256
    $region41: #{tpu_custom_call.1} parent=1 // pred_fallthru
      _
    %351 = vsyncpa [#allocation3], 1
    %352 = vsyncpa [#allocation4], 1

</llo_original>
